<compile_context>
chip_gen: v7x
topology: tpu7x:2x2x1
jax: 0.10.0
libtpu: 0.0.40
codegen_flags: <defaults>
</compile_context>

<pallas_src>
import numpy as np
import jax
import jax.numpy as jnp
from jax.experimental import pallas as pl
from jax.experimental.pallas import tpu as pltpu

W0 = 16                  # original spatial width; flat-index stride everywhere
HW = W0 * W0             # 256 lanes per batch element (2 full lane tiles)
PAD = 128                # trailing zero pad lanes (only >=17 actually needed)
SHIFTS = (0, 1, W0, W0 + 1)   # flat-index shifts of the 2x2 taps (dy*16+dx)

# Packed parameter buffer layout: f32, shape (40, 128), built once at init.
#   rows  0: 8 , cols 0:16 -> conv2 weights as (cout=8 , 4*cin=16)
#   rows  8:16 , cols 0:32 -> conv3 weights as (cout=8 , 4*cin=32)
#   rows 16:32 , cols 0:32 -> conv4 weights as (cout=16, 4*cin=32)
#   rows 32:36 , cols 0: 2 -> conv1 weights as (cout=4 , cin=2)
#   every layer's bias lives in column BIAS_COL of its own row band.
P_ROWS, P_COLS = 40, 128
BIAS_COL = 32
ROW_L2, ROW_L3, ROW_L4, ROW_L1 = 0, 8, 16, 32


def _net_conv2d_kernel(x_ref, p_ref, o_ref, act_ref, slab_ref):
    # x_ref   : (bs, 2, 256)    NCHW input, spatial flattened on lanes
    # p_ref   : (40, 128)       packed weights + biases (layout above)
    # o_ref   : (bs, 16, 256)   layer-4 output on the padded 16x16 grid
    # act_ref : (8, L+128) f32  current activation, channels on sublanes,
    #                           batch*spatial flattened on lanes + zero pad
    # slab_ref: (32, L) f32     shifted-tap slab for the single per-layer dot
    bs = x_ref.shape[0]
    L = bs * HW

    # Zero ONLY the trailing pad lanes; lanes 0:L are always written by a
    # layer before they are read within this same grid step.
    act_ref[:, L:L + PAD] = jnp.zeros((act_ref.shape[0], PAD), jnp.float32)

    # ---- layer 1: Conv2d(2, 4, 1) + ReLU on the VPU (broadcast FMAs) ----
    w1 = p_ref[ROW_L1:ROW_L1 + 4, 0:2]                       # (4, 2)
    b1 = p_ref[ROW_L1:ROW_L1 + 4, BIAS_COL:BIAS_COL + 1]     # (4, 1)
    for n in range(bs):
        xn = x_ref[n].astype(jnp.float32)                    # (2, 256)
        a1 = w1[:, 0:1] * xn[0:1, :] + w1[:, 1:2] * xn[1:2, :] + b1
        act_ref[0:4, n * HW:(n + 1) * HW] = jnp.maximum(a1, 0.0)

    # ---- layers 2..4: Conv2d(.,.,2) + ReLU, one MXU matmul per layer ----
    def conv2x2_relu(row0, cin, cout):
        # Assemble the (4*cin, L) shifted-tap slab (static offsets).
        for t, s in enumerate(SHIFTS):
            slab_ref[t * cin:(t + 1) * cin, :] = act_ref[0:cin, s:s + L]
        w = p_ref[row0:row0 + cout, 0:4 * cin]                     # (cout, 4cin)
        b = p_ref[row0:row0 + cout, BIAS_COL:BIAS_COL + 1]         # (cout, 1)
        y = jnp.dot(w, slab_ref[0:4 * cin, :],
                    preferred_element_type=jnp.float32)            # (cout, L)
        return jnp.maximum(y + b, 0.0)                             # bias + ReLU

    act_ref[0:8, 0:L] = conv2x2_relu(ROW_L2, cin=4, cout=8)   # valid 15x15
    act_ref[0:8, 0:L] = conv2x2_relu(ROW_L3, cin=8, cout=8)   # valid 14x14
    y4 = conv2x2_relu(ROW_L4, cin=8, cout=16)                 # valid 13x13
    for n in range(bs):
        o_ref[n] = y4[:, n * HW:(n + 1) * HW].astype(o_ref.dtype)


def pack_params(params):
    """Pack all conv weights/biases into one (40,128) f32 buffer. Run ONCE at
    init time so the jitted forward dispatches no repacking ops."""
    (w1, b1), (w2, b2), (w3, b3), (w4, b4) = params
    buf = np.zeros((P_ROWS, P_COLS), np.float32)

    def put2x2(row0, w, b):
        cout, cin, kh, kw = w.shape
        # OIHW -> (cout, kh*kw*cin): column index = (dy*2+dx)*cin + ci,
        # matching the slab row order (tap-major, channel-minor).
        w_cat = np.transpose(np.asarray(w), (0, 2, 3, 1)).reshape(cout, kh * kw * cin)
        buf[row0:row0 + cout, 0:kh * kw * cin] = w_cat
        buf[row0:row0 + cout, BIAS_COL] = np.asarray(b)

    buf[ROW_L1:ROW_L1 + 4, 0:2] = np.asarray(w1).reshape(4, 2)
    buf[ROW_L1:ROW_L1 + 4, BIAS_COL] = np.asarray(b1)
    put2x2(ROW_L2, w2, b2)
    put2x2(ROW_L3, w3, b3)
    put2x2(ROW_L4, w4, b4)
    return jnp.asarray(buf)


def net_conv2d_forward(x_nchw, packed_params, *, steps=1):
    """Fused forward. x: (N, 2, 16, 16) f32 NCHW; packed_params from
    pack_params().  Returns the PADDED lane-dense output (N, 16, 256); the
    valid (N, 16, 13, 13) window is a consumer-side view (see __main__).
    steps=1 is best on v5e/v6e (single grid step); steps=2 lets v7x's two
    TensorCores each take half the batch."""
    N, C0, H0, Wd = x_nchw.shape
    assert (C0, H0, Wd) == (2, W0, W0), "kernel specialized to the module's shapes"
    assert N % steps == 0
    bs = N // steps
    L = bs * HW

    x_flat = x_nchw.reshape(N, C0, HW)            # free reshape, stays NCHW

    return pl.pallas_call(
        _net_conv2d_kernel,
        out_shape=jax.ShapeDtypeStruct((N, 16, HW), x_nchw.dtype),
        grid_spec=pltpu.PrefetchScalarGridSpec(
            num_scalar_prefetch=0,
            grid=(steps,),
            in_specs=[
                pl.BlockSpec((bs, C0, HW), lambda i: (i, 0, 0)),
                pl.BlockSpec((P_ROWS, P_COLS), lambda i: (0, 0)),
            ],
            out_specs=pl.BlockSpec((bs, 16, HW), lambda i: (i, 0, 0)),
            scratch_shapes=[
                pltpu.VMEM((8, L + PAD), jnp.float32),   # activation buffer
                pltpu.VMEM((32, L), jnp.float32),        # shifted-tap slab
            ],
        ),
        compiler_params=pltpu.CompilerParams(
            dimension_semantics=("parallel",)),
    )(x_flat, packed_params)


def extract_valid_nchw(out_padded):
    """Consumer-side lazy view: padded (N,16,256) -> module output (N,16,13,13)."""
    N = out_padded.shape[0]
    Hout = W0 - 3
    return out_padded.reshape(N, 16, W0, W0)[:, :, :Hout, :Hout]


def init_conv_params(key, cin, cout, k):
    """torch.nn.Conv2d default init: U(+-1/sqrt(fan_in)); weight in OIHW layout."""
    kw, kb = jax.random.split(key)
    fan_in = cin * k * k
    bound = 1.0 / (fan_in ** 0.5)
    w = jax.random.uniform(kw, (cout, cin, k, k), jnp.float32,
                           minval=-bound, maxval=bound)
    b = jax.random.uniform(kb, (cout,), jnp.float32, minval=-bound, maxval=bound)
    return w, b


def _reference_forward(x_nchw, params):
    """Pure-JAX reference (lax.conv, NCHW/OIHW) to validate the Pallas kernel."""
    x = x_nchw
    for (w_oihw, b) in params:
        y = jax.lax.conv_general_dilated(
            x, w_oihw, window_strides=(1, 1), padding="VALID",
            dimension_numbers=("NCHW", "OIHW", "NCHW"))
        x = jnp.maximum(y + b.reshape(1, -1, 1, 1), 0.0)
    return x


if __name__ == "__main__":
    key = jax.random.PRNGKey(0)
    kx, k1, k2, k3, k4 = jax.random.split(key, 5)

    # Layer configs from the PyTorch module:
    #   conv1: Conv2d(2, 4, 1), conv2: Conv2d(4, 8, 2),
    #   conv3: Conv2d(8, 8, 2), conv4: Conv2d(8, 16, 2)
    params = [
        init_conv_params(k1, 2, 4, 1),
        init_conv_params(k2, 4, 8, 2),
        init_conv_params(k3, 8, 8, 2),
        init_conv_params(k4, 8, 16, 2),
    ]
    packed = pack_params(params)                 # one-time, outside the forward

    # NCHW input consistent with the module (2 input channels).
    x = jax.random.normal(kx, (2, 2, 16, 16), jnp.float32)

    fwd = jax.jit(net_conv2d_forward, static_argnames=("steps",))
    out_padded = jax.block_until_ready(fwd(x, packed))
    assert out_padded.shape == (2, 16, HW), out_padded.shape

    out = extract_valid_nchw(out_padded)         # lazy consumer-side 13x13 view
    assert out.shape == (2, 16, 13, 13), out.shape

    ref = jax.block_until_ready(_reference_forward(x, params))
    assert jnp.allclose(out, ref, atol=1e-4, rtol=1e-4), "mismatch vs reference"

    print("KERNEL_OK")
</pallas_src>

<mosaic_0001>
module attributes {stable_mosaic.version = 11 : i64} {
  func.func @_net_conv2d_kernel(%arg0: i32, %arg1: memref<2x2x256xf32, #tpu.memory_space<vmem>>, %arg2: memref<40x128xf32, #tpu.memory_space<vmem>>, %arg3: memref<2x16x256xf32, #tpu.memory_space<vmem>>, %arg4: memref<8x640xf32, #tpu.memory_space<vmem>>, %arg5: memref<32x512xf32, #tpu.memory_space<vmem>>) attributes {dimension_semantics = [#tpu.dimension_semantics<parallel>], iteration_bounds = array<i64: 1>, scalar_prefetch = 0 : i64, scratch_operands = 2 : i64, tpu.core_type = #tpu.core_type<tc>, window_params = [{transform_indices = @transform_0, window_bounds = array<i64: 2, 2, 256>}, {pipeline_mode = #tpu.pipeline_mode<synchronous>, transform_indices = @transform_1, window_bounds = array<i64: 40, 128>}, {transform_indices = @transform_2, window_bounds = array<i64: 2, 16, 256>}]} {
    %cst = arith.constant 0.000000e+00 : f32
    %0 = vector.broadcast %cst : f32 to vector<8x128xf32>
    %c0 = arith.constant 0 : index
    %c512 = arith.constant 512 : index
    %1 = vector.load %arg4[%c0, %c512] : memref<8x640xf32, #tpu.memory_space<vmem>>, vector<8x128xf32>
    tpu.vector_store %arg4[%c0, %c512], %0 {strides = array<i32>} : memref<8x640xf32, #tpu.memory_space<vmem>>, vector<8x128xf32>,
    %c32 = arith.constant 32 : index
    %c0_0 = arith.constant 0 : index
    %2 = vector.load %arg2[%c32, %c0_0] : memref<40x128xf32, #tpu.memory_space<vmem>>, vector<4x2xf32>
    %c32_1 = arith.constant 32 : index
    %c32_2 = arith.constant 32 : index
    %3 = vector.load %arg2[%c32_1, %c32_2] : memref<40x128xf32, #tpu.memory_space<vmem>>, vector<4x1xf32>
    %c0_3 = arith.constant 0 : index
    %c0_4 = arith.constant 0 : index
    %c0_5 = arith.constant 0 : index
    %4 = vector.load %arg1[%c0_3, %c0_4, %c0_5] : memref<2x2x256xf32, #tpu.memory_space<vmem>>, vector<1x2x256xf32>
    %5 = vector.shape_cast %4 : vector<1x2x256xf32> to vector<2x256xf32>
    %6 = vector.extract_strided_slice %2 {offsets = [0, 0], sizes = [4, 1], strides = [1, 1]} : vector<4x2xf32> to vector<4x1xf32>
    %7 = vector.extract_strided_slice %5 {offsets = [0, 0], sizes = [1, 256], strides = [1, 1]} : vector<2x256xf32> to vector<1x256xf32>
    %8 = vector.broadcast %6 : vector<4x1xf32> to vector<4x256xf32>
    %9 = vector.broadcast %7 : vector<1x256xf32> to vector<4x256xf32>
    %10 = arith.mulf %8, %9 : vector<4x256xf32>
    %11 = vector.extract_strided_slice %2 {offsets = [0, 1], sizes = [4, 1], strides = [1, 1]} : vector<4x2xf32> to vector<4x1xf32>
    %12 = vector.extract_strided_slice %5 {offsets = [1, 0], sizes = [1, 256], strides = [1, 1]} : vector<2x256xf32> to vector<1x256xf32>
    %13 = vector.broadcast %11 : vector<4x1xf32> to vector<4x256xf32>
    %14 = vector.broadcast %12 : vector<1x256xf32> to vector<4x256xf32>
    %15 = arith.mulf %13, %14 : vector<4x256xf32>
    %16 = arith.addf %10, %15 : vector<4x256xf32>
    %17 = vector.broadcast %3 : vector<4x1xf32> to vector<4x256xf32>
    %18 = arith.addf %16, %17 : vector<4x256xf32>
    %cst_6 = arith.constant 0.000000e+00 : f32
    %19 = vector.broadcast %cst_6 : f32 to vector<4x256xf32>
    %20 = arith.maximumf %18, %19 : vector<4x256xf32>
    %c0_7 = arith.constant 0 : index
    %c0_8 = arith.constant 0 : index
    %21 = vector.load %arg4[%c0_7, %c0_8] : memref<8x640xf32, #tpu.memory_space<vmem>>, vector<4x256xf32>
    tpu.vector_store %arg4[%c0_7, %c0_8], %20 {strides = array<i32>} : memref<8x640xf32, #tpu.memory_space<vmem>>, vector<4x256xf32>,
    %c1 = arith.constant 1 : index
    %c0_9 = arith.constant 0 : index
    %c0_10 = arith.constant 0 : index
    %22 = vector.load %arg1[%c1, %c0_9, %c0_10] : memref<2x2x256xf32, #tpu.memory_space<vmem>>, vector<1x2x256xf32>
    %23 = vector.shape_cast %22 : vector<1x2x256xf32> to vector<2x256xf32>
    %24 = vector.extract_strided_slice %2 {offsets = [0, 0], sizes = [4, 1], strides = [1, 1]} : vector<4x2xf32> to vector<4x1xf32>
    %25 = vector.extract_strided_slice %23 {offsets = [0, 0], sizes = [1, 256], strides = [1, 1]} : vector<2x256xf32> to vector<1x256xf32>
    %26 = vector.broadcast %24 : vector<4x1xf32> to vector<4x256xf32>
    %27 = vector.broadcast %25 : vector<1x256xf32> to vector<4x256xf32>
    %28 = arith.mulf %26, %27 : vector<4x256xf32>
    %29 = vector.extract_strided_slice %2 {offsets = [0, 1], sizes = [4, 1], strides = [1, 1]} : vector<4x2xf32> to vector<4x1xf32>
    %30 = vector.extract_strided_slice %23 {offsets = [1, 0], sizes = [1, 256], strides = [1, 1]} : vector<2x256xf32> to vector<1x256xf32>
    %31 = vector.broadcast %29 : vector<4x1xf32> to vector<4x256xf32>
    %32 = vector.broadcast %30 : vector<1x256xf32> to vector<4x256xf32>
    %33 = arith.mulf %31, %32 : vector<4x256xf32>
    %34 = arith.addf %28, %33 : vector<4x256xf32>
    %35 = vector.broadcast %3 : vector<4x1xf32> to vector<4x256xf32>
    %36 = arith.addf %34, %35 : vector<4x256xf32>
    %cst_11 = arith.constant 0.000000e+00 : f32
    %37 = vector.broadcast %cst_11 : f32 to vector<4x256xf32>
    %38 = arith.maximumf %36, %37 : vector<4x256xf32>
    %c0_12 = arith.constant 0 : index
    %c256 = arith.constant 256 : index
    %39 = vector.load %arg4[%c0_12, %c256] : memref<8x640xf32, #tpu.memory_space<vmem>>, vector<4x256xf32>
    tpu.vector_store %arg4[%c0_12, %c256], %38 {strides = array<i32>} : memref<8x640xf32, #tpu.memory_space<vmem>>, vector<4x256xf32>,
    %c0_13 = arith.constant 0 : index
    %c0_14 = arith.constant 0 : index
    %40 = vector.load %arg4[%c0_13, %c0_14] : memref<8x640xf32, #tpu.memory_space<vmem>>, vector<4x512xf32>
    %c0_15 = arith.constant 0 : index
    %c0_16 = arith.constant 0 : index
    %41 = vector.load %arg5[%c0_15, %c0_16] : memref<32x512xf32, #tpu.memory_space<vmem>>, vector<4x512xf32>
    tpu.vector_store %arg5[%c0_15, %c0_16], %40 {strides = array<i32>} : memref<32x512xf32, #tpu.memory_space<vmem>>, vector<4x512xf32>,
    %c0_17 = arith.constant 0 : index
    %c1_18 = arith.constant 1 : index
    %42 = vector.load %arg4[%c0_17, %c1_18] : memref<8x640xf32, #tpu.memory_space<vmem>>, vector<4x512xf32>
    %c4 = arith.constant 4 : index
    %c0_19 = arith.constant 0 : index
    %43 = vector.load %arg5[%c4, %c0_19] : memref<32x512xf32, #tpu.memory_space<vmem>>, vector<4x512xf32>
    tpu.vector_store %arg5[%c4, %c0_19], %42 {strides = array<i32>} : memref<32x512xf32, #tpu.memory_space<vmem>>, vector<4x512xf32>,
    %c0_20 = arith.constant 0 : index
    %c16 = arith.constant 16 : index
    %44 = vector.load %arg4[%c0_20, %c16] : memref<8x640xf32, #tpu.memory_space<vmem>>, vector<4x512xf32>
    %c8 = arith.constant 8 : index
    %c0_21 = arith.constant 0 : index
    %45 = vector.load %arg5[%c8, %c0_21] : memref<32x512xf32, #tpu.memory_space<vmem>>, vector<4x512xf32>
    tpu.vector_store %arg5[%c8, %c0_21], %44 {strides = array<i32>} : memref<32x512xf32, #tpu.memory_space<vmem>>, vector<4x512xf32>,
    %c0_22 = arith.constant 0 : index
    %c17 = arith.constant 17 : index
    %46 = vector.load %arg4[%c0_22, %c17] : memref<8x640xf32, #tpu.memory_space<vmem>>, vector<4x512xf32>
    %c12 = arith.constant 12 : index
    %c0_23 = arith.constant 0 : index
    %47 = vector.load %arg5[%c12, %c0_23] : memref<32x512xf32, #tpu.memory_space<vmem>>, vector<4x512xf32>
    tpu.vector_store %arg5[%c12, %c0_23], %46 {strides = array<i32>} : memref<32x512xf32, #tpu.memory_space<vmem>>, vector<4x512xf32>,
    %c0_24 = arith.constant 0 : index
    %c0_25 = arith.constant 0 : index
    %48 = vector.load %arg2[%c0_24, %c0_25] : memref<40x128xf32, #tpu.memory_space<vmem>>, vector<8x16xf32>
    %c0_26 = arith.constant 0 : index
    %c32_27 = arith.constant 32 : index
    %49 = vector.load %arg2[%c0_26, %c32_27] : memref<40x128xf32, #tpu.memory_space<vmem>>, vector<8x1xf32>
    %c0_28 = arith.constant 0 : index
    %c0_29 = arith.constant 0 : index
    %50 = vector.load %arg5[%c0_28, %c0_29] : memref<32x512xf32, #tpu.memory_space<vmem>>, vector<16x512xf32>
    %cst_30 = arith.constant dense<0.000000e+00> : vector<8x512xf32>
    %51 = tpu.matmul %48, %50, %cst_30 {dimension_numbers = #tpu.dot_dimension_numbers<[1], [0], [0], [1], [0, 0, 1, 1], [], []>} : vector<8x16xf32>, vector<16x512xf32>, vector<8x512xf32> -> vector<8x512xf32>
    %52 = vector.broadcast %49 : vector<8x1xf32> to vector<8x512xf32>
    %53 = arith.addf %51, %52 : vector<8x512xf32>
    %cst_31 = arith.constant 0.000000e+00 : f32
    %54 = vector.broadcast %cst_31 : f32 to vector<8x512xf32>
    %55 = arith.maximumf %53, %54 : vector<8x512xf32>
    %c0_32 = arith.constant 0 : index
    %c0_33 = arith.constant 0 : index
    %56 = vector.load %arg4[%c0_32, %c0_33] : memref<8x640xf32, #tpu.memory_space<vmem>>, vector<8x512xf32>
    tpu.vector_store %arg4[%c0_32, %c0_33], %55 {strides = array<i32>} : memref<8x640xf32, #tpu.memory_space<vmem>>, vector<8x512xf32>,
    %c0_34 = arith.constant 0 : index
    %c0_35 = arith.constant 0 : index
    %57 = vector.load %arg4[%c0_34, %c0_35] : memref<8x640xf32, #tpu.memory_space<vmem>>, vector<8x512xf32>
    %c0_36 = arith.constant 0 : index
    %c0_37 = arith.constant 0 : index
    %58 = vector.load %arg5[%c0_36, %c0_37] : memref<32x512xf32, #tpu.memory_space<vmem>>, vector<8x512xf32>
    tpu.vector_store %arg5[%c0_36, %c0_37], %57 {strides = array<i32>} : memref<32x512xf32, #tpu.memory_space<vmem>>, vector<8x512xf32>,
    %c0_38 = arith.constant 0 : index
    %c1_39 = arith.constant 1 : index
    %59 = vector.load %arg4[%c0_38, %c1_39] : memref<8x640xf32, #tpu.memory_space<vmem>>, vector<8x512xf32>
    %c8_40 = arith.constant 8 : index
    %c0_41 = arith.constant 0 : index
    %60 = vector.load %arg5[%c8_40, %c0_41] : memref<32x512xf32, #tpu.memory_space<vmem>>, vector<8x512xf32>
    tpu.vector_store %arg5[%c8_40, %c0_41], %59 {strides = array<i32>} : memref<32x512xf32, #tpu.memory_space<vmem>>, vector<8x512xf32>,
    %c0_42 = arith.constant 0 : index
    %c16_43 = arith.constant 16 : index
    %61 = vector.load %arg4[%c0_42, %c16_43] : memref<8x640xf32, #tpu.memory_space<vmem>>, vector<8x512xf32>
    %c16_44 = arith.constant 16 : index
    %c0_45 = arith.constant 0 : index
    %62 = vector.load %arg5[%c16_44, %c0_45] : memref<32x512xf32, #tpu.memory_space<vmem>>, vector<8x512xf32>
    tpu.vector_store %arg5[%c16_44, %c0_45], %61 {strides = array<i32>} : memref<32x512xf32, #tpu.memory_space<vmem>>, vector<8x512xf32>,
    %c0_46 = arith.constant 0 : index
    %c17_47 = arith.constant 17 : index
    %63 = vector.load %arg4[%c0_46, %c17_47] : memref<8x640xf32, #tpu.memory_space<vmem>>, vector<8x512xf32>
    %c24 = arith.constant 24 : index
    %c0_48 = arith.constant 0 : index
    %64 = vector.load %arg5[%c24, %c0_48] : memref<32x512xf32, #tpu.memory_space<vmem>>, vector<8x512xf32>
    tpu.vector_store %arg5[%c24, %c0_48], %63 {strides = array<i32>} : memref<32x512xf32, #tpu.memory_space<vmem>>, vector<8x512xf32>,
    %c8_49 = arith.constant 8 : index
    %c0_50 = arith.constant 0 : index
    %65 = vector.load %arg2[%c8_49, %c0_50] : memref<40x128xf32, #tpu.memory_space<vmem>>, vector<8x32xf32>
    %c8_51 = arith.constant 8 : index
    %c32_52 = arith.constant 32 : index
    %66 = vector.load %arg2[%c8_51, %c32_52] : memref<40x128xf32, #tpu.memory_space<vmem>>, vector<8x1xf32>
    %c0_53 = arith.constant 0 : index
    %c0_54 = arith.constant 0 : index
    %67 = vector.load %arg5[%c0_53, %c0_54] : memref<32x512xf32, #tpu.memory_space<vmem>>, vector<32x512xf32>
    %cst_55 = arith.constant dense<0.000000e+00> : vector<8x512xf32>
    %68 = tpu.matmul %65, %67, %cst_55 {dimension_numbers = #tpu.dot_dimension_numbers<[1], [0], [0], [1], [0, 0, 1, 1], [], []>} : vector<8x32xf32>, vector<32x512xf32>, vector<8x512xf32> -> vector<8x512xf32>
    %69 = vector.broadcast %66 : vector<8x1xf32> to vector<8x512xf32>
    %70 = arith.addf %68, %69 : vector<8x512xf32>
    %cst_56 = arith.constant 0.000000e+00 : f32
    %71 = vector.broadcast %cst_56 : f32 to vector<8x512xf32>
    %72 = arith.maximumf %70, %71 : vector<8x512xf32>
    %c0_57 = arith.constant 0 : index
    %c0_58 = arith.constant 0 : index
    %73 = vector.load %arg4[%c0_57, %c0_58] : memref<8x640xf32, #tpu.memory_space<vmem>>, vector<8x512xf32>
    tpu.vector_store %arg4[%c0_57, %c0_58], %72 {strides = array<i32>} : memref<8x640xf32, #tpu.memory_space<vmem>>, vector<8x512xf32>,
    %c0_59 = arith.constant 0 : index
    %c0_60 = arith.constant 0 : index
    %74 = vector.load %arg4[%c0_59, %c0_60] : memref<8x640xf32, #tpu.memory_space<vmem>>, vector<8x512xf32>
    %c0_61 = arith.constant 0 : index
    %c0_62 = arith.constant 0 : index
    %75 = vector.load %arg5[%c0_61, %c0_62] : memref<32x512xf32, #tpu.memory_space<vmem>>, vector<8x512xf32>
    tpu.vector_store %arg5[%c0_61, %c0_62], %74 {strides = array<i32>} : memref<32x512xf32, #tpu.memory_space<vmem>>, vector<8x512xf32>,
    %c0_63 = arith.constant 0 : index
    %c1_64 = arith.constant 1 : index
    %76 = vector.load %arg4[%c0_63, %c1_64] : memref<8x640xf32, #tpu.memory_space<vmem>>, vector<8x512xf32>
    %c8_65 = arith.constant 8 : index
    %c0_66 = arith.constant 0 : index
    %77 = vector.load %arg5[%c8_65, %c0_66] : memref<32x512xf32, #tpu.memory_space<vmem>>, vector<8x512xf32>
    tpu.vector_store %arg5[%c8_65, %c0_66], %76 {strides = array<i32>} : memref<32x512xf32, #tpu.memory_space<vmem>>, vector<8x512xf32>,
    %c0_67 = arith.constant 0 : index
    %c16_68 = arith.constant 16 : index
    %78 = vector.load %arg4[%c0_67, %c16_68] : memref<8x640xf32, #tpu.memory_space<vmem>>, vector<8x512xf32>
    %c16_69 = arith.constant 16 : index
    %c0_70 = arith.constant 0 : index
    %79 = vector.load %arg5[%c16_69, %c0_70] : memref<32x512xf32, #tpu.memory_space<vmem>>, vector<8x512xf32>
    tpu.vector_store %arg5[%c16_69, %c0_70], %78 {strides = array<i32>} : memref<32x512xf32, #tpu.memory_space<vmem>>, vector<8x512xf32>,
    %c0_71 = arith.constant 0 : index
    %c17_72 = arith.constant 17 : index
    %80 = vector.load %arg4[%c0_71, %c17_72] : memref<8x640xf32, #tpu.memory_space<vmem>>, vector<8x512xf32>
    %c24_73 = arith.constant 24 : index
    %c0_74 = arith.constant 0 : index
    %81 = vector.load %arg5[%c24_73, %c0_74] : memref<32x512xf32, #tpu.memory_space<vmem>>, vector<8x512xf32>
    tpu.vector_store %arg5[%c24_73, %c0_74], %80 {strides = array<i32>} : memref<32x512xf32, #tpu.memory_space<vmem>>, vector<8x512xf32>,
    %c16_75 = arith.constant 16 : index
    %c0_76 = arith.constant 0 : index
    %82 = vector.load %arg2[%c16_75, %c0_76] : memref<40x128xf32, #tpu.memory_space<vmem>>, vector<16x32xf32>
    %c16_77 = arith.constant 16 : index
    %c32_78 = arith.constant 32 : index
    %83 = vector.load %arg2[%c16_77, %c32_78] : memref<40x128xf32, #tpu.memory_space<vmem>>, vector<16x1xf32>
    %c0_79 = arith.constant 0 : index
    %c0_80 = arith.constant 0 : index
    %84 = vector.load %arg5[%c0_79, %c0_80] : memref<32x512xf32, #tpu.memory_space<vmem>>, vector<32x512xf32>
    %cst_81 = arith.constant dense<0.000000e+00> : vector<16x512xf32>
    %85 = tpu.matmul %82, %84, %cst_81 {dimension_numbers = #tpu.dot_dimension_numbers<[1], [0], [0], [1], [0, 0, 1, 1], [], []>} : vector<16x32xf32>, vector<32x512xf32>, vector<16x512xf32> -> vector<16x512xf32>
    %86 = vector.broadcast %83 : vector<16x1xf32> to vector<16x512xf32>
    %87 = arith.addf %85, %86 : vector<16x512xf32>
    %cst_82 = arith.constant 0.000000e+00 : f32
    %88 = vector.broadcast %cst_82 : f32 to vector<16x512xf32>
    %89 = arith.maximumf %87, %88 : vector<16x512xf32>
    %90 = vector.extract_strided_slice %89 {offsets = [0, 0], sizes = [16, 256], strides = [1, 1]} : vector<16x512xf32> to vector<16x256xf32>
    %c0_83 = arith.constant 0 : index
    %c0_84 = arith.constant 0 : index
    %c0_85 = arith.constant 0 : index
    %91 = vector.load %arg3[%c0_83, %c0_84, %c0_85] : memref<2x16x256xf32, #tpu.memory_space<vmem>>, vector<1x16x256xf32>
    %92 = vector.shape_cast %91 : vector<1x16x256xf32> to vector<16x256xf32>
    %93 = vector.shape_cast %90 : vector<16x256xf32> to vector<1x16x256xf32>
    tpu.vector_store %arg3[%c0_83, %c0_84, %c0_85], %93 {strides = array<i32>} : memref<2x16x256xf32, #tpu.memory_space<vmem>>, vector<1x16x256xf32>,
    %94 = vector.extract_strided_slice %89 {offsets = [0, 256], sizes = [16, 256], strides = [1, 1]} : vector<16x512xf32> to vector<16x256xf32>
    %c1_86 = arith.constant 1 : index
    %c0_87 = arith.constant 0 : index
    %c0_88 = arith.constant 0 : index
    %95 = vector.load %arg3[%c1_86, %c0_87, %c0_88] : memref<2x16x256xf32, #tpu.memory_space<vmem>>, vector<1x16x256xf32>
    %96 = vector.shape_cast %95 : vector<1x16x256xf32> to vector<16x256xf32>
    %97 = vector.shape_cast %94 : vector<16x256xf32> to vector<1x16x256xf32>
    tpu.vector_store %arg3[%c1_86, %c0_87, %c0_88], %97 {strides = array<i32>} : memref<2x16x256xf32, #tpu.memory_space<vmem>>, vector<1x16x256xf32>,
    return
  }
  func.func @transform_0(%arg0: i32) -> (i32, i32, i32) {
    %c0_i32 = arith.constant 0 : i32
    %c0_i32_0 = arith.constant 0 : i32
    %c0_i32_1 = arith.constant 0 : i32
    return %arg0, %c0_i32, %c0_i32_0 : i32, i32, i32
  }
  func.func @transform_1(%arg0: i32) -> (i32, i32) {
    %c0_i32 = arith.constant 0 : i32
    %c0_i32_0 = arith.constant 0 : i32
    %c0_i32_1 = arith.constant 0 : i32
    return %c0_i32, %c0_i32_0 : i32, i32
  }
  func.func @transform_2(%arg0: i32) -> (i32, i32, i32) {
    %c0_i32 = arith.constant 0 : i32
    %c0_i32_0 = arith.constant 0 : i32
    %c0_i32_1 = arith.constant 0 : i32
    return %arg0, %c0_i32, %c0_i32_0 : i32, i32, i32
  }
}

</mosaic_0001>

<llo_original>
// kernel: net_conv2d_forward.1
$region0: #{net_conv2d_forward.1}
  #allocation0 [shape = 'u32[]', space=smem, size = 0x4, offset = 0x4, fixed_abs, tag = 'smem constant byte address 0x4 - core index']
  #allocation1 [shape = 'u32[144,128]{1,0:T(1,128)}', space=vmem, size = 0x12000, scoped, tag = 'internal scratch']
  #allocation2 [shape = 'f32[8,640]{1,0:T(8,128)}', space=vmem, size = 0x5000, scoped, tag = 'scratch operand']
  #allocation3 [shape = 'f32[32,512]{1,0:T(8,128)}', space=vmem, size = 0x10000, scoped, tag = 'scratch operand']
  %s0 = inlined_call_operand.vmem [shape: f32[2,2,256], index: 0, kind: input, shape index: {}]
  %s1 = inlined_call_operand.vmem [shape: f32[40,128], index: 1, kind: input, shape index: {}]
  %s2 = inlined_call_operand.hbm [shape: f32[2,16,256], index: 2, kind: output, shape index: {}]
  %s3 = sld [smem:[#allocation0]]
  $region18: #{net_conv2d_forward.1} parent=0
    _
  %s5 = ssub.s32 1, %s3
  %s6 = scalar_select 0, %s5, %s3
  $region1: #{net_conv2d_forward.1} parent=0
    #allocation4 [shape = 'u8[32768]{0}', space=vmem, size = 0x8000, scoped, tag = 'output window, operand 0, single buffered']
    #allocation5 [shape = 's32[1]{0}', space=sflag, size = 0x4, scoped, tag = 'scoped memory for net_conv2d_forward.1']
    %7 = vsyncpa [#allocation5], 0
    // Predicated region
    $region2: #{net_conv2d_forward.1} parent=1 // pred_check
      _
    $region3: #{net_conv2d_forward.1} parent=1 // pred_check_branch
      %9 = sbr.rel (0) target = $region5
    $region4: #{net_conv2d_forward.1} parent=1 // pred_region
      _
    $region5: #{net_conv2d_forward.1} parent=1 // pred_fallthru
      _
    // Predicated region
    $region6: #{net_conv2d_forward.1} parent=1 // pred_check
      _
    $region7: #{net_conv2d_forward.1} parent=1 // pred_check_branch
      %11 = sbr.rel (0) target = $region9
    $region8: #{net_conv2d_forward.1} parent=1 // pred_region
      _
    $region9: #{net_conv2d_forward.1} parent=1 // pred_fallthru
      _
    %12 = vst [vmem:[#allocation2 + $0x20] sm:$0xff] 0.0
    %v13 = vld [vmem:[%s1 + $0x20] sm:$0xf]
    %v14 = vld [vmem:[%s0] sm:$0xf]
    %16 = vset.pattern.permute.xlu0 0
    %17 = vperm.xlu0 %16, %v13
    %v18 = vpop.permute.xlu0 %17
    %v21 = vlaneseq
    %v22 = vshrl.u32 %v21, 7
    %v23 = vsub.s32 0, %v22
    %v24 = vrot.slane %v14, %v23
    %v25 = vlaneseq
    %v26 = vshrl.u32 %v25, 7
    %v27 = vsub.s32 2, %v26
    %v28 = vrot.slane %v14, %v27
    %v31 = vlaneseq
    %v32 = vshrl.u32 %v31, 7
    %v33 = vsub.s32 0, %v32
    %v34 = vrot.slane %v24, %v33
    %v35 = vlaneseq
    %v36 = vshrl.u32 %v35, 7
    %v37 = vsub.s32 0, %v36
    %v38 = vrot.slane %v28, %v37
    %v39 = vmul.f32 %v18, %v34
    %v40 = vmul.f32 %v18, %v38
    %41 = vset.pattern.permute.xlu0 1
    %42 = vperm.xlu0 %41, %v13
    %v43 = vpop.permute.xlu0 %42
    %v45 = vlaneseq
    %v46 = vshrl.u32 %v45, 7
    %v47 = vsub.s32 1, %v46
    %v48 = vrot.slane %v14, %v47
    %v49 = vlaneseq
    %v50 = vshrl.u32 %v49, 7
    %v51 = vsub.s32 3, %v50
    %v52 = vrot.slane %v14, %v51
    %v55 = vlaneseq
    %v56 = vshrl.u32 %v55, 7
    %v57 = vsub.s32 1, %v56
    %v58 = vrot.slane %v48, %v57
    %v59 = vlaneseq
    %v60 = vshrl.u32 %v59, 7
    %v61 = vsub.s32 1, %v60
    %v62 = vrot.slane %v52, %v61
    %v63 = vmul.f32 %v43, %v58
    %v64 = vmul.f32 %v43, %v62
    %v65 = vadd.f32 %v39, %v63
    %v66 = vadd.f32 %v40, %v64
    %67 = vset.pattern.permute.xlu0 32
    %68 = vperm.xlu0 %67, %v13
    %v69 = vpop.permute.xlu0 %68
    %v71 = vadd.f32 %v65, %v69
    %v72 = vadd.f32 %v66, %v69
    %v73 = vmax.f32 %v71, 0.0
    %v74 = vmax.f32 %v72, 0.0
    %75 = vst [vmem:[#allocation2] sm:$0xf] %v73
    %76 = vst [vmem:[#allocation2 + $0x8] sm:$0xf] %v74
    %s77 = scalar_lea.vmem %s0, 4
    %v78 = vld [vmem:[%s77] sm:$0xf]
    %v80 = vlaneseq
    %v81 = vshrl.u32 %v80, 7
    %v82 = vsub.s32 0, %v81
    %v83 = vrot.slane %v78, %v82
    %v84 = vlaneseq
    %v85 = vshrl.u32 %v84, 7
    %v86 = vsub.s32 2, %v85
    %v87 = vrot.slane %v78, %v86
    %v90 = vlaneseq
    %v91 = vshrl.u32 %v90, 7
    %v92 = vsub.s32 0, %v91
    %v93 = vrot.slane %v83, %v92
    %v94 = vlaneseq
    %v95 = vshrl.u32 %v94, 7
    %v96 = vsub.s32 0, %v95
    %v97 = vrot.slane %v87, %v96
    %v98 = vmul.f32 %v18, %v93
    %v99 = vmul.f32 %v18, %v97
    %v100 = vlaneseq
    %v101 = vshrl.u32 %v100, 7
    %v102 = vsub.s32 1, %v101
    %v103 = vrot.slane %v78, %v102
    %v104 = vlaneseq
    %v105 = vshrl.u32 %v104, 7
    %v106 = vsub.s32 3, %v105
    %v107 = vrot.slane %v78, %v106
    %v110 = vlaneseq
    %v111 = vshrl.u32 %v110, 7
    %v112 = vsub.s32 1, %v111
    %v113 = vrot.slane %v103, %v112
    %v114 = vlaneseq
    %v115 = vshrl.u32 %v114, 7
    %v116 = vsub.s32 1, %v115
    %v117 = vrot.slane %v107, %v116
    %v118 = vmul.f32 %v43, %v113
    %v119 = vmul.f32 %v43, %v117
    %v120 = vadd.f32 %v98, %v118
    %v121 = vadd.f32 %v99, %v119
    %v122 = vadd.f32 %v120, %v69
    %v123 = vadd.f32 %v121, %v69
    %v124 = vmax.f32 %v122, 0.0
    %v125 = vmax.f32 %v123, 0.0
    %126 = vst [vmem:[#allocation2 + $0x10] sm:$0xf] %v124
    %127 = vst [vmem:[#allocation2 + $0x18] sm:$0xf] %v125
    %v128 = vld [vmem:[#allocation2] sm:$0xf]
    %v129 = vld [vmem:[#allocation2 + $0x8] sm:$0xf]
    %v130 = vld [vmem:[#allocation2 + $0x10] sm:$0xf]
    %v131 = vld [vmem:[#allocation2 + $0x18] sm:$0xf]
    %132 = vst [vmem:[#allocation3] sm:$0xf] %v128
    %133 = vst [vmem:[#allocation3 + $0x8] sm:$0xf] %v129
    %134 = vst [vmem:[#allocation3 + $0x10] sm:$0xf] %v130
    %135 = vst [vmem:[#allocation3 + $0x18] sm:$0xf] %v131
    %v136 = vld [vmem:[#allocation2] sm:$0xf]
    %v137 = vld [vmem:[#allocation2 + $0x8] sm:$0xf]
    %v138 = vld [vmem:[#allocation2 + $0x10] sm:$0xf]
    %v139 = vld [vmem:[#allocation2 + $0x18] sm:$0xf]
    %v140 = vld [vmem:[#allocation2 + $0x20] sm:$0xf]
    %v146 = vrot.slane %v136, 4
    %v147 = vrot.slane %v137, 4
    %v148 = vrot.slane %v138, 4
    %v149 = vrot.slane %v139, 4
    %v150 = vrot.slane %v140, 4
    %151 = vrot.lane.b32.xlu0 %v146, 127
    %v152 = vpop.permute.xlu0 %151
    %153 = vrot.lane.b32.xlu0 %v147, 127
    %v154 = vpop.permute.xlu0 %153
    %155 = vrot.lane.b32.xlu0 %v148, 127
    %v156 = vpop.permute.xlu0 %155
    %157 = vrot.lane.b32.xlu0 %v149, 127
    %v158 = vpop.permute.xlu0 %157
    %159 = vrot.lane.b32.xlu0 %v150, 127
    %v160 = vpop.permute.xlu0 %159
    %vm161 = vcmask 1039360
    %v162 = vsel %vm161, %v152, %v154
    %v163 = vsel %vm161, %v154, %v156
    %v164 = vsel %vm161, %v156, %v158
    %v165 = vsel %vm161, %v158, %v160
    %170 = vst [vmem:[#allocation3] sm:$0xf0] %v162
    %171 = vst [vmem:[#allocation3 + $0x8] sm:$0xf0] %v163
    %172 = vst [vmem:[#allocation3 + $0x10] sm:$0xf0] %v164
    %173 = vst [vmem:[#allocation3 + $0x18] sm:$0xf0] %v165
    %v174 = vld [vmem:[#allocation2] sm:$0xf]
    %v175 = vld [vmem:[#allocation2 + $0x8] sm:$0xf]
    %v176 = vld [vmem:[#allocation2 + $0x10] sm:$0xf]
    %v177 = vld [vmem:[#allocation2 + $0x18] sm:$0xf]
    %v178 = vld [vmem:[#allocation2 + $0x20] sm:$0xf]
    %184 = vrot.lane.b32.xlu0 %v174, 112
    %v185 = vpop.permute.xlu0 %184
    %186 = vrot.lane.b32.xlu0 %v175, 112
    %v187 = vpop.permute.xlu0 %186
    %188 = vrot.lane.b32.xlu0 %v176, 112
    %v189 = vpop.permute.xlu0 %188
    %190 = vrot.lane.b32.xlu0 %v177, 112
    %v191 = vpop.permute.xlu0 %190
    %192 = vrot.lane.b32.xlu0 %v178, 112
    %v193 = vpop.permute.xlu0 %192
    %vm194 = vcmask 916480
    %v195 = vsel %vm194, %v185, %v187
    %v196 = vsel %vm194, %v187, %v189
    %v197 = vsel %vm194, %v189, %v191
    %v198 = vsel %vm194, %v191, %v193
    %203 = vst [vmem:[#allocation3 + $0x20] sm:$0xf] %v195
    %204 = vst [vmem:[#allocation3 + $0x28] sm:$0xf] %v196
    %205 = vst [vmem:[#allocation3 + $0x30] sm:$0xf] %v197
    %206 = vst [vmem:[#allocation3 + $0x38] sm:$0xf] %v198
    %v207 = vld [vmem:[#allocation2] sm:$0xf]
    %v208 = vld [vmem:[#allocation2 + $0x8] sm:$0xf]
    %v209 = vld [vmem:[#allocation2 + $0x10] sm:$0xf]
    %v210 = vld [vmem:[#allocation2 + $0x18] sm:$0xf]
    %v211 = vld [vmem:[#allocation2 + $0x20] sm:$0xf]
    %v217 = vrot.slane %v207, 4
    %v218 = vrot.slane %v208, 4
    %v219 = vrot.slane %v209, 4
    %v220 = vrot.slane %v210, 4
    %v221 = vrot.slane %v211, 4
    %222 = vrot.lane.b32.xlu0 %v217, 111
    %v223 = vpop.permute.xlu0 %222
    %224 = vrot.lane.b32.xlu0 %v218, 111
    %v225 = vpop.permute.xlu0 %224
    %226 = vrot.lane.b32.xlu0 %v219, 111
    %v227 = vpop.permute.xlu0 %226
    %228 = vrot.lane.b32.xlu0 %v220, 111
    %v229 = vpop.permute.xlu0 %228
    %230 = vrot.lane.b32.xlu0 %v221, 111
    %v231 = vpop.permute.xlu0 %230
    %vm232 = vcmask 908288
    %v233 = vsel %vm232, %v223, %v225
    %v234 = vsel %vm232, %v225, %v227
    %v235 = vsel %vm232, %v227, %v229
    %v236 = vsel %vm232, %v229, %v231
    %241 = vst [vmem:[#allocation3 + $0x20] sm:$0xf0] %v233
    %242 = vst [vmem:[#allocation3 + $0x28] sm:$0xf0] %v234
    %243 = vst [vmem:[#allocation3 + $0x30] sm:$0xf0] %v235
    %244 = vst [vmem:[#allocation3 + $0x38] sm:$0xf0] %v236
    %v245 = vld [vmem:[%s1] sm:$0xff]
    %v246 = vld [vmem:[#allocation3] sm:$0xff]
    %v247 = vld [vmem:[#allocation3 + $0x8] sm:$0xff]
    %v248 = vld [vmem:[#allocation3 + $0x10] sm:$0xff]
    %v249 = vld [vmem:[#allocation3 + $0x18] sm:$0xff]
    %v250 = vld [vmem:[#allocation3 + $0x20] sm:$0xff]
    %v251 = vld [vmem:[#allocation3 + $0x28] sm:$0xff]
    %v252 = vld [vmem:[#allocation3 + $0x30] sm:$0xff]
    %v253 = vld [vmem:[#allocation3 + $0x38] sm:$0xff]
    %255 = vset.pattern.permute.xlu0 32
    %256 = vperm.xlu0 %255, %v245
    %v257 = vpop.permute.xlu0 %256
    %vm259 = vcmask 130048
    %v260 = vsel %vm259, %v245, 0
    %262 = vmatprep.subr.mxu0 %v247
    %263 = vmatpush1.msra.mxu0 %v246
    %264 = vmatprep.subr.mxu0 %v251
    %265 = vmatpush1.msra.mxu0 %v250
    %266 = vmatprep.subr.mxu0 0.0
    %267 = vmatpush1.msra.mxu0 0.0
    %268 = vmatprep.subr.mxu0 0.0
    %269 = vmatpush1.msra.mxu0 0.0
    %270 = vmatprep.subr.mxu0 0.0
    %271 = vmatpush1.msra.mxu0 0.0
    %272 = vmatprep.subr.mxu0 0.0
    %273 = vmatpush1.msra.mxu0 0.0
    %274 = vmatprep.subr.mxu0 0.0
    %275 = vmatpush1.msra.mxu0 0.0
    %276 = vmatprep.subr.mxu0 0.0
    %277 = vmatpush1.msra.mxu0 0.0
    %278 = vmatprep.subr.mxu0 0.0
    %279 = vmatpush1.msra.mxu0 0.0
    %280 = vmatprep.subr.mxu0 0.0
    %281 = vmatpush1.msra.mxu0 0.0
    %282 = vmatprep.subr.mxu0 0.0
    %283 = vmatpush1.msra.mxu0 0.0
    %284 = vmatprep.subr.mxu0 0.0
    %285 = vmatpush1.msra.mxu0 0.0
    %286 = vmatprep.subr.mxu0 0.0
    %287 = vmatpush1.msra.mxu0 0.0
    %288 = vmatprep.subr.mxu0 0.0
    %289 = vmatpush1.msra.mxu0 0.0
    %290 = vmatprep.subr.mxu0 0.0
    %291 = vmatpush1.msra.mxu0 0.0
    %292 = vmatprep.subr.mxu0 0.0
    %293 = vmatpush1.msra.mxu0 0.0
    %294 = vmatprep.subr.mxu0 0.0
    %295 = vmatpush1.msra.mxu0 0.0
    %296 = vmatprep.subr.mxu0 0.0
    %297 = vmatpush1.msra.mxu0 0.0
    %298 = vmatprep.subr.mxu0 0.0
    %299 = vmatpush1.msra.mxu0 0.0
    %300 = vmatprep.subr.mxu0 0.0
    %301 = vmatpush1.msra.mxu0 0.0
    %302 = vmatprep.subr.mxu0 0.0
    %303 = vmatpush1.msra.mxu0 0.0
    %304 = vmatprep.subr.mxu0 0.0
    %305 = vmatpush1.msra.mxu0 0.0
    %306 = vmatprep.subr.mxu0 0.0
    %307 = vmatpush1.msra.mxu0 0.0
    %308 = vmatprep.subr.mxu0 0.0
    %309 = vmatpush1.msra.mxu0 0.0
    %310 = vmatprep.subr.mxu0 0.0
    %311 = vmatpush1.msra.mxu0 0.0
    %312 = vmatprep.subr.mxu0 0.0
    %313 = vmatpush1.msra.mxu0 0.0
    %314 = vmatprep.subr.mxu0 0.0
    %315 = vmatpush1.msra.mxu0 0.0
    %316 = vmatprep.subr.mxu0 0.0
    %317 = vmatpush1.msra.mxu0 0.0
    %318 = vmatprep.subr.mxu0 0.0
    %319 = vmatpush1.msra.mxu0 0.0
    %320 = vmatprep.subr.mxu0 0.0
    %321 = vmatpush1.msra.mxu0 0.0
    %322 = vmatprep.subr.mxu0 0.0
    %323 = vmatpush1.msra.mxu0 0.0
    %324 = vmatprep.subr.mxu0 0.0
    %325 = vmatpush1.msra.mxu0 0.0
    %326 = vmatprep.mubr.f32.mxu0 0.0
    %327 = vmatmul.mubr.f32.gmra.mrb[0].mxu0 %v260
    %v328 = vpop.f32.mrb[0].mxu0
    %v329 = vadd.f32 %v257, %v328
    %v330 = vpop.f32.mrb[0].mxu0
    %v331 = vadd.f32 %v257, %v330
    %332 = vdwg.mxu0
    %333 = vmatprep.subr.mxu0 %v249
    %334 = vmatpush1.msra.mxu0 %v248
    %335 = vmatprep.subr.mxu0 %v253
    %336 = vmatpush1.msra.mxu0 %v252
    %337 = vmatprep.subr.mxu0 0.0
    %338 = vmatpush1.msra.mxu0 0.0
    %339 = vmatprep.subr.mxu0 0.0
    %340 = vmatpush1.msra.mxu0 0.0
    %341 = vmatprep.subr.mxu0 0.0
    %342 = vmatpush1.msra.mxu0 0.0
    %343 = vmatprep.subr.mxu0 0.0
    %344 = vmatpush1.msra.mxu0 0.0
    %345 = vmatprep.subr.mxu0 0.0
    %346 = vmatpush1.msra.mxu0 0.0
    %347 = vmatprep.subr.mxu0 0.0
    %348 = vmatpush1.msra.mxu0 0.0
    %349 = vmatprep.subr.mxu0 0.0
    %350 = vmatpush1.msra.mxu0 0.0
    %351 = vmatprep.subr.mxu0 0.0
    %352 = vmatpush1.msra.mxu0 0.0
    %353 = vmatprep.subr.mxu0 0.0
    %354 = vmatpush1.msra.mxu0 0.0
    %355 = vmatprep.subr.mxu0 0.0
    %356 = vmatpush1.msra.mxu0 0.0
    %357 = vmatprep.subr.mxu0 0.0
    %358 = vmatpush1.msra.mxu0 0.0
    %359 = vmatprep.subr.mxu0 0.0
    %360 = vmatpush1.msra.mxu0 0.0
    %361 = vmatprep.subr.mxu0 0.0
    %362 = vmatpush1.msra.mxu0 0.0
    %363 = vmatprep.subr.mxu0 0.0
    %364 = vmatpush1.msra.mxu0 0.0
    %365 = vmatprep.subr.mxu0 0.0
    %366 = vmatpush1.msra.mxu0 0.0
    %367 = vmatprep.subr.mxu0 0.0
    %368 = vmatpush1.msra.mxu0 0.0
    %369 = vmatprep.subr.mxu0 0.0
    %370 = vmatpush1.msra.mxu0 0.0
    %371 = vmatprep.subr.mxu0 0.0
    %372 = vmatpush1.msra.mxu0 0.0
    %373 = vmatprep.subr.mxu0 0.0
    %374 = vmatpush1.msra.mxu0 0.0
    %375 = vmatprep.subr.mxu0 0.0
    %376 = vmatpush1.msra.mxu0 0.0
    %377 = vmatprep.subr.mxu0 0.0
    %378 = vmatpush1.msra.mxu0 0.0
    %379 = vmatprep.subr.mxu0 0.0
    %380 = vmatpush1.msra.mxu0 0.0
    %381 = vmatprep.subr.mxu0 0.0
    %382 = vmatpush1.msra.mxu0 0.0
    %383 = vmatprep.subr.mxu0 0.0
    %384 = vmatpush1.msra.mxu0 0.0
    %385 = vmatprep.subr.mxu0 0.0
    %386 = vmatpush1.msra.mxu0 0.0
    %387 = vmatprep.subr.mxu0 0.0
    %388 = vmatpush1.msra.mxu0 0.0
    %389 = vmatprep.subr.mxu0 0.0
    %390 = vmatpush1.msra.mxu0 0.0
    %391 = vmatprep.subr.mxu0 0.0
    %392 = vmatpush1.msra.mxu0 0.0
    %393 = vmatprep.subr.mxu0 0.0
    %394 = vmatpush1.msra.mxu0 0.0
    %395 = vmatprep.subr.mxu0 0.0
    %396 = vmatpush1.msra.mxu0 0.0
    %397 = vmatprep.mubr.f32.mxu0 0.0
    %398 = vmatmul.mubr.f32.gmra.mrb[0].mxu0 %v260
    %v399 = vpop.f32.mrb[0].mxu0
    %v400 = vadd.f32 %v257, %v399
    %v401 = vpop.f32.mrb[0].mxu0
    %v402 = vadd.f32 %v257, %v401
    %403 = vdwg.mxu0
    %v404 = vmax.f32 %v329, 0.0
    %v405 = vmax.f32 %v331, 0.0
    %v406 = vmax.f32 %v400, 0.0
    %v407 = vmax.f32 %v402, 0.0
    %408 = vst [vmem:[#allocation2] sm:$0xff] %v404
    %409 = vst [vmem:[#allocation2 + $0x8] sm:$0xff] %v405
    %410 = vst [vmem:[#allocation2 + $0x10] sm:$0xff] %v406
    %411 = vst [vmem:[#allocation2 + $0x18] sm:$0xff] %v407
    %v412 = vld [vmem:[#allocation2] sm:$0xff]
    %v413 = vld [vmem:[#allocation2 + $0x8] sm:$0xff]
    %v414 = vld [vmem:[#allocation2 + $0x10] sm:$0xff]
    %v415 = vld [vmem:[#allocation2 + $0x18] sm:$0xff]
    %416 = vst [vmem:[#allocation3] sm:$0xff] %v412
    %417 = vst [vmem:[#allocation3 + $0x8] sm:$0xff] %v413
    %418 = vst [vmem:[#allocation3 + $0x10] sm:$0xff] %v414
    %419 = vst [vmem:[#allocation3 + $0x18] sm:$0xff] %v415
    %v420 = vld [vmem:[#allocation2] sm:$0xff]
    %v421 = vld [vmem:[#allocation2 + $0x8] sm:$0xff]
    %v422 = vld [vmem:[#allocation2 + $0x10] sm:$0xff]
    %v423 = vld [vmem:[#allocation2 + $0x18] sm:$0xff]
    %v424 = vld [vmem:[#allocation2 + $0x20] sm:$0xff]
    %430 = vrot.lane.b32.xlu0 %v420, 127
    %v431 = vpop.permute.xlu0 %430
    %432 = vrot.lane.b32.xlu0 %v421, 127
    %v433 = vpop.permute.xlu0 %432
    %434 = vrot.lane.b32.xlu0 %v422, 127
    %v435 = vpop.permute.xlu0 %434
    %436 = vrot.lane.b32.xlu0 %v423, 127
    %v437 = vpop.permute.xlu0 %436
    %438 = vrot.lane.b32.xlu0 %v424, 127
    %v439 = vpop.permute.xlu0 %438
    %v440 = vsel %vm161, %v431, %v433
    %v441 = vsel %vm161, %v433, %v435
    %v442 = vsel %vm161, %v435, %v437
    %v443 = vsel %vm161, %v437, %v439
    %448 = vst [vmem:[#allocation3 + $0x20] sm:$0xff] %v440
    %449 = vst [vmem:[#allocation3 + $0x28] sm:$0xff] %v441
    %450 = vst [vmem:[#allocation3 + $0x30] sm:$0xff] %v442
    %451 = vst [vmem:[#allocation3 + $0x38] sm:$0xff] %v443
    %v452 = vld [vmem:[#allocation2] sm:$0xff]
    %v453 = vld [vmem:[#allocation2 + $0x8] sm:$0xff]
    %v454 = vld [vmem:[#allocation2 + $0x10] sm:$0xff]
    %v455 = vld [vmem:[#allocation2 + $0x18] sm:$0xff]
    %v456 = vld [vmem:[#allocation2 + $0x20] sm:$0xff]
    %462 = vrot.lane.b32.xlu0 %v452, 112
    %v463 = vpop.permute.xlu0 %462
    %464 = vrot.lane.b32.xlu0 %v453, 112
    %v465 = vpop.permute.xlu0 %464
    %466 = vrot.lane.b32.xlu0 %v454, 112
    %v467 = vpop.permute.xlu0 %466
    %468 = vrot.lane.b32.xlu0 %v455, 112
    %v469 = vpop.permute.xlu0 %468
    %470 = vrot.lane.b32.xlu0 %v456, 112
    %v471 = vpop.permute.xlu0 %470
    %v472 = vsel %vm194, %v463, %v465
    %v473 = vsel %vm194, %v465, %v467
    %v474 = vsel %vm194, %v467, %v469
    %v475 = vsel %vm194, %v469, %v471
    %480 = vst [vmem:[#allocation3 + $0x40] sm:$0xff] %v472
    %481 = vst [vmem:[#allocation3 + $0x48] sm:$0xff] %v473
    %482 = vst [vmem:[#allocation3 + $0x50] sm:$0xff] %v474
    %483 = vst [vmem:[#allocation3 + $0x58] sm:$0xff] %v475
    %v484 = vld [vmem:[#allocation2] sm:$0xff]
    %v485 = vld [vmem:[#allocation2 + $0x8] sm:$0xff]
    %v486 = vld [vmem:[#allocation2 + $0x10] sm:$0xff]
    %v487 = vld [vmem:[#allocation2 + $0x18] sm:$0xff]
    %v488 = vld [vmem:[#allocation2 + $0x20] sm:$0xff]
    %494 = vrot.lane.b32.xlu0 %v484, 111
    %v495 = vpop.permute.xlu0 %494
    %496 = vrot.lane.b32.xlu0 %v485, 111
    %v497 = vpop.permute.xlu0 %496
    %498 = vrot.lane.b32.xlu0 %v486, 111
    %v499 = vpop.permute.xlu0 %498
    %500 = vrot.lane.b32.xlu0 %v487, 111
    %v501 = vpop.permute.xlu0 %500
    %502 = vrot.lane.b32.xlu0 %v488, 111
    %v503 = vpop.permute.xlu0 %502
    %v504 = vsel %vm232, %v495, %v497
    %v505 = vsel %vm232, %v497, %v499
    %v506 = vsel %vm232, %v499, %v501
    %v507 = vsel %vm232, %v501, %v503
    %512 = vst [vmem:[#allocation3 + $0x60] sm:$0xff] %v504
    %513 = vst [vmem:[#allocation3 + $0x68] sm:$0xff] %v505
    %514 = vst [vmem:[#allocation3 + $0x70] sm:$0xff] %v506
    %515 = vst [vmem:[#allocation3 + $0x78] sm:$0xff] %v507
    %v516 = vld [vmem:[%s1 + $0x8] sm:$0xff]
    %v517 = vld [vmem:[#allocation3] sm:$0xff]
    %v518 = vld [vmem:[#allocation3 + $0x8] sm:$0xff]
    %v519 = vld [vmem:[#allocation3 + $0x10] sm:$0xff]
    %v520 = vld [vmem:[#allocation3 + $0x18] sm:$0xff]
    %v521 = vld [vmem:[#allocation3 + $0x20] sm:$0xff]
    %v522 = vld [vmem:[#allocation3 + $0x28] sm:$0xff]
    %v523 = vld [vmem:[#allocation3 + $0x30] sm:$0xff]
    %v524 = vld [vmem:[#allocation3 + $0x38] sm:$0xff]
    %v525 = vld [vmem:[#allocation3 + $0x40] sm:$0xff]
    %v526 = vld [vmem:[#allocation3 + $0x48] sm:$0xff]
    %v527 = vld [vmem:[#allocation3 + $0x50] sm:$0xff]
    %v528 = vld [vmem:[#allocation3 + $0x58] sm:$0xff]
    %v529 = vld [vmem:[#allocation3 + $0x60] sm:$0xff]
    %v530 = vld [vmem:[#allocation3 + $0x68] sm:$0xff]
    %v531 = vld [vmem:[#allocation3 + $0x70] sm:$0xff]
    %v532 = vld [vmem:[#allocation3 + $0x78] sm:$0xff]
    %534 = vset.pattern.permute.xlu0 32
    %535 = vperm.xlu0 %534, %v516
    %v536 = vpop.permute.xlu0 %535
    %vm538 = vcmask 261120
    %v539 = vsel %vm538, %v516, 0
    %541 = vmatprep.subr.mxu0 %v518
    %542 = vmatpush1.msra.mxu0 %v517
    %543 = vmatprep.subr.mxu0 %v522
    %544 = vmatpush1.msra.mxu0 %v521
    %545 = vmatprep.subr.mxu0 %v526
    %546 = vmatpush1.msra.mxu0 %v525
    %547 = vmatprep.subr.mxu0 %v530
    %548 = vmatpush1.msra.mxu0 %v529
    %549 = vmatprep.subr.mxu0 0.0
    %550 = vmatpush1.msra.mxu0 0.0
    %551 = vmatprep.subr.mxu0 0.0
    %552 = vmatpush1.msra.mxu0 0.0
    %553 = vmatprep.subr.mxu0 0.0
    %554 = vmatpush1.msra.mxu0 0.0
    %555 = vmatprep.subr.mxu0 0.0
    %556 = vmatpush1.msra.mxu0 0.0
    %557 = vmatprep.subr.mxu0 0.0
    %558 = vmatpush1.msra.mxu0 0.0
    %559 = vmatprep.subr.mxu0 0.0
    %560 = vmatpush1.msra.mxu0 0.0
    %561 = vmatprep.subr.mxu0 0.0
    %562 = vmatpush1.msra.mxu0 0.0
    %563 = vmatprep.subr.mxu0 0.0
    %564 = vmatpush1.msra.mxu0 0.0
    %565 = vmatprep.subr.mxu0 0.0
    %566 = vmatpush1.msra.mxu0 0.0
    %567 = vmatprep.subr.mxu0 0.0
    %568 = vmatpush1.msra.mxu0 0.0
    %569 = vmatprep.subr.mxu0 0.0
    %570 = vmatpush1.msra.mxu0 0.0
    %571 = vmatprep.subr.mxu0 0.0
    %572 = vmatpush1.msra.mxu0 0.0
    %573 = vmatprep.subr.mxu0 0.0
    %574 = vmatpush1.msra.mxu0 0.0
    %575 = vmatprep.subr.mxu0 0.0
    %576 = vmatpush1.msra.mxu0 0.0
    %577 = vmatprep.subr.mxu0 0.0
    %578 = vmatpush1.msra.mxu0 0.0
    %579 = vmatprep.subr.mxu0 0.0
    %580 = vmatpush1.msra.mxu0 0.0
    %581 = vmatprep.subr.mxu0 0.0
    %582 = vmatpush1.msra.mxu0 0.0
    %583 = vmatprep.subr.mxu0 0.0
    %584 = vmatpush1.msra.mxu0 0.0
    %585 = vmatprep.subr.mxu0 0.0
    %586 = vmatpush1.msra.mxu0 0.0
    %587 = vmatprep.subr.mxu0 0.0
    %588 = vmatpush1.msra.mxu0 0.0
    %589 = vmatprep.subr.mxu0 0.0
    %590 = vmatpush1.msra.mxu0 0.0
    %591 = vmatprep.subr.mxu0 0.0
    %592 = vmatpush1.msra.mxu0 0.0
    %593 = vmatprep.subr.mxu0 0.0
    %594 = vmatpush1.msra.mxu0 0.0
    %595 = vmatprep.subr.mxu0 0.0
    %596 = vmatpush1.msra.mxu0 0.0
    %597 = vmatprep.subr.mxu0 0.0
    %598 = vmatpush1.msra.mxu0 0.0
    %599 = vmatprep.subr.mxu0 0.0
    %600 = vmatpush1.msra.mxu0 0.0
    %601 = vmatprep.subr.mxu0 0.0
    %602 = vmatpush1.msra.mxu0 0.0
    %603 = vmatprep.subr.mxu0 0.0
    %604 = vmatpush1.msra.mxu0 0.0
    %605 = vmatprep.mubr.f32.mxu0 0.0
    %606 = vmatmul.mubr.f32.gmra.mrb[0].mxu0 %v539
    %v607 = vpop.f32.mrb[0].mxu0
    %v608 = vadd.f32 %v536, %v607
    %v609 = vpop.f32.mrb[0].mxu0
    %v610 = vadd.f32 %v536, %v609
    %611 = vdwg.mxu0
    %612 = vmatprep.subr.mxu0 %v520
    %613 = vmatpush1.msra.mxu0 %v519
    %614 = vmatprep.subr.mxu0 %v524
    %615 = vmatpush1.msra.mxu0 %v523
    %616 = vmatprep.subr.mxu0 %v528
    %617 = vmatpush1.msra.mxu0 %v527
    %618 = vmatprep.subr.mxu0 %v532
    %619 = vmatpush1.msra.mxu0 %v531
    %620 = vmatprep.subr.mxu0 0.0
    %621 = vmatpush1.msra.mxu0 0.0
    %622 = vmatprep.subr.mxu0 0.0
    %623 = vmatpush1.msra.mxu0 0.0
    %624 = vmatprep.subr.mxu0 0.0
    %625 = vmatpush1.msra.mxu0 0.0
    %626 = vmatprep.subr.mxu0 0.0
    %627 = vmatpush1.msra.mxu0 0.0
    %628 = vmatprep.subr.mxu0 0.0
    %629 = vmatpush1.msra.mxu0 0.0
    %630 = vmatprep.subr.mxu0 0.0
    %631 = vmatpush1.msra.mxu0 0.0
    %632 = vmatprep.subr.mxu0 0.0
    %633 = vmatpush1.msra.mxu0 0.0
    %634 = vmatprep.subr.mxu0 0.0
    %635 = vmatpush1.msra.mxu0 0.0
    %636 = vmatprep.subr.mxu0 0.0
    %637 = vmatpush1.msra.mxu0 0.0
    %638 = vmatprep.subr.mxu0 0.0
    %639 = vmatpush1.msra.mxu0 0.0
    %640 = vmatprep.subr.mxu0 0.0
    %641 = vmatpush1.msra.mxu0 0.0
    %642 = vmatprep.subr.mxu0 0.0
    %643 = vmatpush1.msra.mxu0 0.0
    %644 = vmatprep.subr.mxu0 0.0
    %645 = vmatpush1.msra.mxu0 0.0
    %646 = vmatprep.subr.mxu0 0.0
    %647 = vmatpush1.msra.mxu0 0.0
    %648 = vmatprep.subr.mxu0 0.0
    %649 = vmatpush1.msra.mxu0 0.0
    %650 = vmatprep.subr.mxu0 0.0
    %651 = vmatpush1.msra.mxu0 0.0
    %652 = vmatprep.subr.mxu0 0.0
    %653 = vmatpush1.msra.mxu0 0.0
    %654 = vmatprep.subr.mxu0 0.0
    %655 = vmatpush1.msra.mxu0 0.0
    %656 = vmatprep.subr.mxu0 0.0
    %657 = vmatpush1.msra.mxu0 0.0
    %658 = vmatprep.subr.mxu0 0.0
    %659 = vmatpush1.msra.mxu0 0.0
    %660 = vmatprep.subr.mxu0 0.0
    %661 = vmatpush1.msra.mxu0 0.0
    %662 = vmatprep.subr.mxu0 0.0
    %663 = vmatpush1.msra.mxu0 0.0
    %664 = vmatprep.subr.mxu0 0.0
    %665 = vmatpush1.msra.mxu0 0.0
    %666 = vmatprep.subr.mxu0 0.0
    %667 = vmatpush1.msra.mxu0 0.0
    %668 = vmatprep.subr.mxu0 0.0
    %669 = vmatpush1.msra.mxu0 0.0
    %670 = vmatprep.subr.mxu0 0.0
    %671 = vmatpush1.msra.mxu0 0.0
    %672 = vmatprep.subr.mxu0 0.0
    %673 = vmatpush1.msra.mxu0 0.0
    %674 = vmatprep.subr.mxu0 0.0
    %675 = vmatpush1.msra.mxu0 0.0
    %676 = vmatprep.mubr.f32.mxu0 0.0
    %677 = vmatmul.mubr.f32.gmra.mrb[0].mxu0 %v539
    %v678 = vpop.f32.mrb[0].mxu0
    %v679 = vadd.f32 %v536, %v678
    %v680 = vpop.f32.mrb[0].mxu0
    %v681 = vadd.f32 %v536, %v680
    %682 = vdwg.mxu0
    %v683 = vmax.f32 %v608, 0.0
    %v684 = vmax.f32 %v610, 0.0
    %v685 = vmax.f32 %v679, 0.0
    %v686 = vmax.f32 %v681, 0.0
    %687 = vst [vmem:[#allocation2] sm:$0xff] %v683
    %688 = vst [vmem:[#allocation2 + $0x8] sm:$0xff] %v684
    %689 = vst [vmem:[#allocation2 + $0x10] sm:$0xff] %v685
    %690 = vst [vmem:[#allocation2 + $0x18] sm:$0xff] %v686
    %v691 = vld [vmem:[#allocation2] sm:$0xff]
    %v692 = vld [vmem:[#allocation2 + $0x8] sm:$0xff]
    %v693 = vld [vmem:[#allocation2 + $0x10] sm:$0xff]
    %v694 = vld [vmem:[#allocation2 + $0x18] sm:$0xff]
    %695 = vst [vmem:[#allocation3] sm:$0xff] %v691
    %696 = vst [vmem:[#allocation3 + $0x8] sm:$0xff] %v692
    %697 = vst [vmem:[#allocation3 + $0x10] sm:$0xff] %v693
    %698 = vst [vmem:[#allocation3 + $0x18] sm:$0xff] %v694
    %v699 = vld [vmem:[#allocation2] sm:$0xff]
    %v700 = vld [vmem:[#allocation2 + $0x8] sm:$0xff]
    %v701 = vld [vmem:[#allocation2 + $0x10] sm:$0xff]
    %v702 = vld [vmem:[#allocation2 + $0x18] sm:$0xff]
    %v703 = vld [vmem:[#allocation2 + $0x20] sm:$0xff]
    %709 = vrot.lane.b32.xlu0 %v699, 127
    %v710 = vpop.permute.xlu0 %709
    %711 = vrot.lane.b32.xlu0 %v700, 127
    %v712 = vpop.permute.xlu0 %711
    %713 = vrot.lane.b32.xlu0 %v701, 127
    %v714 = vpop.permute.xlu0 %713
    %715 = vrot.lane.b32.xlu0 %v702, 127
    %v716 = vpop.permute.xlu0 %715
    %717 = vrot.lane.b32.xlu0 %v703, 127
    %v718 = vpop.permute.xlu0 %717
    %v719 = vsel %vm161, %v710, %v712
    %v720 = vsel %vm161, %v712, %v714
    %v721 = vsel %vm161, %v714, %v716
    %v722 = vsel %vm161, %v716, %v718
    %727 = vst [vmem:[#allocation3 + $0x20] sm:$0xff] %v719
    %728 = vst [vmem:[#allocation3 + $0x28] sm:$0xff] %v720
    %729 = vst [vmem:[#allocation3 + $0x30] sm:$0xff] %v721
    %730 = vst [vmem:[#allocation3 + $0x38] sm:$0xff] %v722
    %v731 = vld [vmem:[#allocation2] sm:$0xff]
    %v732 = vld [vmem:[#allocation2 + $0x8] sm:$0xff]
    %v733 = vld [vmem:[#allocation2 + $0x10] sm:$0xff]
    %v734 = vld [vmem:[#allocation2 + $0x18] sm:$0xff]
    %v735 = vld [vmem:[#allocation2 + $0x20] sm:$0xff]
    %741 = vrot.lane.b32.xlu0 %v731, 112
    %v742 = vpop.permute.xlu0 %741
    %743 = vrot.lane.b32.xlu0 %v732, 112
    %v744 = vpop.permute.xlu0 %743
    %745 = vrot.lane.b32.xlu0 %v733, 112
    %v746 = vpop.permute.xlu0 %745
    %747 = vrot.lane.b32.xlu0 %v734, 112
    %v748 = vpop.permute.xlu0 %747
    %749 = vrot.lane.b32.xlu0 %v735, 112
    %v750 = vpop.permute.xlu0 %749
    %v751 = vsel %vm194, %v742, %v744
    %v752 = vsel %vm194, %v744, %v746
    %v753 = vsel %vm194, %v746, %v748
    %v754 = vsel %vm194, %v748, %v750
    %759 = vst [vmem:[#allocation3 + $0x40] sm:$0xff] %v751
    %760 = vst [vmem:[#allocation3 + $0x48] sm:$0xff] %v752
    %761 = vst [vmem:[#allocation3 + $0x50] sm:$0xff] %v753
    %762 = vst [vmem:[#allocation3 + $0x58] sm:$0xff] %v754
    %v763 = vld [vmem:[#allocation2] sm:$0xff]
    %v764 = vld [vmem:[#allocation2 + $0x8] sm:$0xff]
    %v765 = vld [vmem:[#allocation2 + $0x10] sm:$0xff]
    %v766 = vld [vmem:[#allocation2 + $0x18] sm:$0xff]
    %v767 = vld [vmem:[#allocation2 + $0x20] sm:$0xff]
    %773 = vrot.lane.b32.xlu0 %v763, 111
    %v774 = vpop.permute.xlu0 %773
    %775 = vrot.lane.b32.xlu0 %v764, 111
    %v776 = vpop.permute.xlu0 %775
    %777 = vrot.lane.b32.xlu0 %v765, 111
    %v778 = vpop.permute.xlu0 %777
    %779 = vrot.lane.b32.xlu0 %v766, 111
    %v780 = vpop.permute.xlu0 %779
    %781 = vrot.lane.b32.xlu0 %v767, 111
    %v782 = vpop.permute.xlu0 %781
    %v783 = vsel %vm232, %v774, %v776
    %v784 = vsel %vm232, %v776, %v778
    %v785 = vsel %vm232, %v778, %v780
    %v786 = vsel %vm232, %v780, %v782
    %791 = vst [vmem:[#allocation3 + $0x60] sm:$0xff] %v783
    %792 = vst [vmem:[#allocation3 + $0x68] sm:$0xff] %v784
    %793 = vst [vmem:[#allocation3 + $0x70] sm:$0xff] %v785
    %794 = vst [vmem:[#allocation3 + $0x78] sm:$0xff] %v786
    %v795 = vld [vmem:[%s1 + $0x10] sm:$0xff]
    %v796 = vld [vmem:[%s1 + $0x18] sm:$0xff]
    %v797 = vld [vmem:[#allocation3] sm:$0xff]
    %v798 = vld [vmem:[#allocation3 + $0x8] sm:$0xff]
    %v799 = vld [vmem:[#allocation3 + $0x10] sm:$0xff]
    %v800 = vld [vmem:[#allocation3 + $0x18] sm:$0xff]
    %v801 = vld [vmem:[#allocation3 + $0x20] sm:$0xff]
    %v802 = vld [vmem:[#allocation3 + $0x28] sm:$0xff]
    %v803 = vld [vmem:[#allocation3 + $0x30] sm:$0xff]
    %v804 = vld [vmem:[#allocation3 + $0x38] sm:$0xff]
    %v805 = vld [vmem:[#allocation3 + $0x40] sm:$0xff]
    %v806 = vld [vmem:[#allocation3 + $0x48] sm:$0xff]
    %v807 = vld [vmem:[#allocation3 + $0x50] sm:$0xff]
    %v808 = vld [vmem:[#allocation3 + $0x58] sm:$0xff]
    %v809 = vld [vmem:[#allocation3 + $0x60] sm:$0xff]
    %v810 = vld [vmem:[#allocation3 + $0x68] sm:$0xff]
    %v811 = vld [vmem:[#allocation3 + $0x70] sm:$0xff]
    %v812 = vld [vmem:[#allocation3 + $0x78] sm:$0xff]
    %814 = vset.pattern.permute.xlu0 32
    %815 = vperm.xlu0 %814, %v795
    %v816 = vpop.permute.xlu0 %815
    %819 = vset.pattern.permute.xlu0 32
    %820 = vperm.xlu0 %819, %v796
    %v821 = vpop.permute.xlu0 %820
    %v823 = vsel %vm538, %v795, 0
    %v825 = vsel %vm538, %v796, 0
    %827 = vmatprep.subr.mxu0 %v798
    %828 = vmatpush1.msra.mxu0 %v797
    %829 = vmatprep.subr.mxu0 %v802
    %830 = vmatpush1.msra.mxu0 %v801
    %831 = vmatprep.subr.mxu0 %v806
    %832 = vmatpush1.msra.mxu0 %v805
    %833 = vmatprep.subr.mxu0 %v810
    %834 = vmatpush1.msra.mxu0 %v809
    %835 = vmatprep.subr.mxu0 0.0
    %836 = vmatpush1.msra.mxu0 0.0
    %837 = vmatprep.subr.mxu0 0.0
    %838 = vmatpush1.msra.mxu0 0.0
    %839 = vmatprep.subr.mxu0 0.0
    %840 = vmatpush1.msra.mxu0 0.0
    %841 = vmatprep.subr.mxu0 0.0
    %842 = vmatpush1.msra.mxu0 0.0
    %843 = vmatprep.subr.mxu0 0.0
    %844 = vmatpush1.msra.mxu0 0.0
    %845 = vmatprep.subr.mxu0 0.0
    %846 = vmatpush1.msra.mxu0 0.0
    %847 = vmatprep.subr.mxu0 0.0
    %848 = vmatpush1.msra.mxu0 0.0
    %849 = vmatprep.subr.mxu0 0.0
    %850 = vmatpush1.msra.mxu0 0.0
    %851 = vmatprep.subr.mxu0 0.0
    %852 = vmatpush1.msra.mxu0 0.0
    %853 = vmatprep.subr.mxu0 0.0
    %854 = vmatpush1.msra.mxu0 0.0
    %855 = vmatprep.subr.mxu0 0.0
    %856 = vmatpush1.msra.mxu0 0.0
    %857 = vmatprep.subr.mxu0 0.0
    %858 = vmatpush1.msra.mxu0 0.0
    %859 = vmatprep.subr.mxu0 0.0
    %860 = vmatpush1.msra.mxu0 0.0
    %861 = vmatprep.subr.mxu0 0.0
    %862 = vmatpush1.msra.mxu0 0.0
    %863 = vmatprep.subr.mxu0 0.0
    %864 = vmatpush1.msra.mxu0 0.0
    %865 = vmatprep.subr.mxu0 0.0
    %866 = vmatpush1.msra.mxu0 0.0
    %867 = vmatprep.subr.mxu0 0.0
    %868 = vmatpush1.msra.mxu0 0.0
    %869 = vmatprep.subr.mxu0 0.0
    %870 = vmatpush1.msra.mxu0 0.0
    %871 = vmatprep.subr.mxu0 0.0
    %872 = vmatpush1.msra.mxu0 0.0
    %873 = vmatprep.subr.mxu0 0.0
    %874 = vmatpush1.msra.mxu0 0.0
    %875 = vmatprep.subr.mxu0 0.0
    %876 = vmatpush1.msra.mxu0 0.0
    %877 = vmatprep.subr.mxu0 0.0
    %878 = vmatpush1.msra.mxu0 0.0
    %879 = vmatprep.subr.mxu0 0.0
    %880 = vmatpush1.msra.mxu0 0.0
    %881 = vmatprep.subr.mxu0 0.0
    %882 = vmatpush1.msra.mxu0 0.0
    %883 = vmatprep.subr.mxu0 0.0
    %884 = vmatpush1.msra.mxu0 0.0
    %885 = vmatprep.subr.mxu0 0.0
    %886 = vmatpush1.msra.mxu0 0.0
    %887 = vmatprep.subr.mxu0 0.0
    %888 = vmatpush1.msra.mxu0 0.0
    %889 = vmatprep.subr.mxu0 0.0
    %890 = vmatpush1.msra.mxu0 0.0
    %891 = vmatprep.mubr.f32.mxu0 0.0
    %892 = vmatmul.mubr.f32.gmra.mrb[0].mxu0 %v823
    %v893 = vpop.f32.mrb[0].mxu0
    %v894 = vadd.f32 %v816, %v893
    %v895 = vpop.f32.mrb[0].mxu0
    %v896 = vadd.f32 %v816, %v895
    %897 = vmatprep.mubr.f32.mxu0 0.0
    %898 = vmatmul.mubr.f32.gmra.mrb[0].mxu0 %v825
    %v899 = vpop.f32.mrb[0].mxu0
    %v900 = vadd.f32 %v821, %v899
    %v901 = vpop.f32.mrb[0].mxu0
    %v902 = vadd.f32 %v821, %v901
    %903 = vdwg.mxu0
    %904 = vmatprep.subr.mxu0 %v800
    %905 = vmatpush1.msra.mxu0 %v799
    %906 = vmatprep.subr.mxu0 %v804
    %907 = vmatpush1.msra.mxu0 %v803
    %908 = vmatprep.subr.mxu0 %v808
    %909 = vmatpush1.msra.mxu0 %v807
    %910 = vmatprep.subr.mxu0 %v812
    %911 = vmatpush1.msra.mxu0 %v811
    %912 = vmatprep.subr.mxu0 0.0
    %913 = vmatpush1.msra.mxu0 0.0
    %914 = vmatprep.subr.mxu0 0.0
    %915 = vmatpush1.msra.mxu0 0.0
    %916 = vmatprep.subr.mxu0 0.0
    %917 = vmatpush1.msra.mxu0 0.0
    %918 = vmatprep.subr.mxu0 0.0
    %919 = vmatpush1.msra.mxu0 0.0
    %920 = vmatprep.subr.mxu0 0.0
    %921 = vmatpush1.msra.mxu0 0.0
    %922 = vmatprep.subr.mxu0 0.0
    %923 = vmatpush1.msra.mxu0 0.0
    %924 = vmatprep.subr.mxu0 0.0
    %925 = vmatpush1.msra.mxu0 0.0
    %926 = vmatprep.subr.mxu0 0.0
    %927 = vmatpush1.msra.mxu0 0.0
    %928 = vmatprep.subr.mxu0 0.0
    %929 = vmatpush1.msra.mxu0 0.0
    %930 = vmatprep.subr.mxu0 0.0
    %931 = vmatpush1.msra.mxu0 0.0
    %932 = vmatprep.subr.mxu0 0.0
    %933 = vmatpush1.msra.mxu0 0.0
    %934 = vmatprep.subr.mxu0 0.0
    %935 = vmatpush1.msra.mxu0 0.0
    %936 = vmatprep.subr.mxu0 0.0
    %937 = vmatpush1.msra.mxu0 0.0
    %938 = vmatprep.subr.mxu0 0.0
    %939 = vmatpush1.msra.mxu0 0.0
    %940 = vmatprep.subr.mxu0 0.0
    %941 = vmatpush1.msra.mxu0 0.0
    %942 = vmatprep.subr.mxu0 0.0
    %943 = vmatpush1.msra.mxu0 0.0
    %944 = vmatprep.subr.mxu0 0.0
    %945 = vmatpush1.msra.mxu0 0.0
    %946 = vmatprep.subr.mxu0 0.0
    %947 = vmatpush1.msra.mxu0 0.0
    %948 = vmatprep.subr.mxu0 0.0
    %949 = vmatpush1.msra.mxu0 0.0
    %950 = vmatprep.subr.mxu0 0.0
    %951 = vmatpush1.msra.mxu0 0.0
    %952 = vmatprep.subr.mxu0 0.0
    %953 = vmatpush1.msra.mxu0 0.0
    %954 = vmatprep.subr.mxu0 0.0
    %955 = vmatpush1.msra.mxu0 0.0
    %956 = vmatprep.subr.mxu0 0.0
    %957 = vmatpush1.msra.mxu0 0.0
    %958 = vmatprep.subr.mxu0 0.0
    %959 = vmatpush1.msra.mxu0 0.0
    %960 = vmatprep.subr.mxu0 0.0
    %961 = vmatpush1.msra.mxu0 0.0
    %962 = vmatprep.subr.mxu0 0.0
    %963 = vmatpush1.msra.mxu0 0.0
    %964 = vmatprep.subr.mxu0 0.0
    %965 = vmatpush1.msra.mxu0 0.0
    %966 = vmatprep.subr.mxu0 0.0
    %967 = vmatpush1.msra.mxu0 0.0
    %968 = vmatprep.mubr.f32.mxu0 0.0
    %969 = vmatmul.mubr.f32.gmra.mrb[0].mxu0 %v823
    %v970 = vpop.f32.mrb[0].mxu0
    %v971 = vadd.f32 %v816, %v970
    %v972 = vpop.f32.mrb[0].mxu0
    %v973 = vadd.f32 %v816, %v972
    %974 = vmatprep.mubr.f32.mxu0 0.0
    %975 = vmatmul.mubr.f32.gmra.mrb[0].mxu0 %v825
    %v976 = vpop.f32.mrb[0].mxu0
    %v977 = vadd.f32 %v821, %v976
    %v978 = vpop.f32.mrb[0].mxu0
    %v979 = vadd.f32 %v821, %v978
    %980 = vdwg.mxu0
    %v981 = vmax.f32 %v894, 0.0
    %v982 = vmax.f32 %v896, 0.0
    %v983 = vmax.f32 %v971, 0.0
    %v984 = vmax.f32 %v973, 0.0
    %v985 = vmax.f32 %v900, 0.0
    %v986 = vmax.f32 %v902, 0.0
    %v987 = vmax.f32 %v977, 0.0
    %v988 = vmax.f32 %v979, 0.0
    %989 = vst [vmem:[#allocation4] sm:$0xff] %v981
    %990 = vst [vmem:[#allocation4 + $0x8] sm:$0xff] %v982
    %991 = vst [vmem:[#allocation4 + $0x10] sm:$0xff] %v985
    %992 = vst [vmem:[#allocation4 + $0x18] sm:$0xff] %v986
    %s993 = scalar_lea.vmem [#allocation4], 32
    %994 = vst [vmem:[%s993] sm:$0xff] %v983
    %995 = vst [vmem:[%s993 + $0x8] sm:$0xff] %v984
    %996 = vst [vmem:[%s993 + $0x10] sm:$0xff] %v987
    %997 = vst [vmem:[%s993 + $0x18] sm:$0xff] %v988
    // Predicated region
    $region10: #{net_conv2d_forward.1} parent=1 // pred_check
      _
    $region11: #{net_conv2d_forward.1} parent=1 // pred_check_branch
      %999 = sbr.rel (0) target = $region13
    $region12: #{net_conv2d_forward.1} parent=1 // pred_region
      %s1001 = ssub.s32 1024, 1024
      %1002 = vsyncadd [#allocation5], %s1001
      %s1003 = sshll.u32 [#allocation4], 4
      %s1004 = int_to_ptr.vmem [resolvable:$true] %s1003
      %1009 = dma.vmem_to_hbm [thread:$0]  %s1004, 1024, %s2, [#allocation5], 256, 256, 16
    $region13: #{net_conv2d_forward.1} parent=1 // pred_fallthru
      _
    // Predicated region
    $region14: #{net_conv2d_forward.1} parent=1 // pred_check
      _
    $region15: #{net_conv2d_forward.1} parent=1 // pred_check_branch
      %1011 = sbr.rel (0) target = $region17
    $region16: #{net_conv2d_forward.1} parent=1 // pred_region
      %1012 = dma.done [#allocation5], 1024
    $region17: #{net_conv2d_forward.1} parent=1 // pred_fallthru
      _
    %1013 = vsyncpa [#allocation5], 1

</llo_original>
